<compile_context>
chip_gen: v7x
topology: tpu7x:2x2x1
jax: 0.10.0
libtpu: 0.0.40
codegen_flags: <defaults>
</compile_context>

<pallas_src>
import functools

import jax
import jax.numpy as jnp
from jax.experimental import pallas as pl
from jax.experimental.pallas import tpu as pltpu


# -----------------------------------------------------------------------------
# Kernel: streaming sum/max pooling over spatial tiles + FC/sigmoid epilogue.
# -----------------------------------------------------------------------------
def _channel_attention_kernel(x_ref, w_ref, b2_ref, o_ref,
                              sum_acc, max_acc,
                              *, inv_hw, num_lane_chunks, lane_width):
    # x_ref   : [1, C, tile_hw]   current (batch-block, spatial-tile) slab,
    #                             spatial on lanes (native NCHW layout)
    # w_ref   : [C, C]            fc1 weight, transposed to [in, out]
    # b2_ref  : [1, C]            2 * fc1 bias
    # o_ref   : [1, 1, C]         sigmoid gate for this batch element
    # sum_acc : [1, C, lane_width] f32 running per-lane partial sums
    # max_acc : [1, C, lane_width] f32 running per-lane partial maxes
    t = pl.program_id(1)  # spatial reduction axis (last, "arbitrary")

    @pl.when(t == 0)
    def _():
        sum_acc[...] = jnp.zeros_like(sum_acc)
        max_acc[...] = jnp.full_like(max_acc, -jnp.inf)

    # Pure VPU elementwise accumulation, 128 lanes at a time (no per-tile
    # cross-lane XLU reduce).
    s = sum_acc[...]
    m = max_acc[...]
    for j in range(num_lane_chunks):
        chunk = x_ref[:, :, j * lane_width:(j + 1) * lane_width]
        chunk = chunk.astype(jnp.float32)
        s = s + chunk
        m = jnp.maximum(m, chunk)
    sum_acc[...] = s
    max_acc[...] = m

    @pl.when(t == pl.num_programs(1) - 1)
    def _():
        # Single cross-lane reduce, then folded Linear + sigmoid.
        pooled = (jnp.sum(sum_acc[...], axis=-1) * inv_hw
                  + jnp.max(max_acc[...], axis=-1))               # [1, C]
        logits = jnp.dot(pooled, w_ref[...],
                         preferred_element_type=jnp.float32) + b2_ref[...]
        o_ref[...] = jax.nn.sigmoid(logits).reshape(o_ref.shape).astype(
            o_ref.dtype)


def _pick_spatial_tile(hw, c, dtype_bytes,
                       x_double_buffer_budget=12 * 1024 * 1024,
                       max_unrolled_chunks=32):
    """Choose (tile_hw, lane_width, num_lane_chunks).

    tile_hw divides HW and is a multiple of 128 (or equals HW when HW is not a
    multiple of 128, which is always a legal full-extent block). The tile is
    sized so the double-buffered input block stays within a conservative VMEM
    budget that is safe on v5e/v6e/v7x."""
    if hw % 128 != 0:
        # Full-extent spatial block fallback (block dim == array dim is legal).
        return hw, hw, 1
    lane_width = 128
    total_chunks = hw // 128
    bytes_per_chunk = c * 128 * dtype_bytes            # batch block size is 1
    max_chunks_by_vmem = max(1, x_double_buffer_budget // (2 * bytes_per_chunk))
    cap = min(total_chunks, max_chunks_by_vmem, max_unrolled_chunks)
    chunks = 1
    for d in range(1, cap + 1):                         # largest divisor <= cap
        if total_chunks % d == 0:
            chunks = d
    return chunks * 128, lane_width, chunks


def channel_attention(x_nchw, fc1_w, fc1_b):
    """x_nchw: [N, C, H, W]; fc1_w: [C, C] (PyTorch [out, in]); fc1_b: [C].

    Returns the attention gate with shape [N, C, 1, 1]."""
    N, C, H, W = x_nchw.shape
    HW = H * W

    # Free reshape (contiguous): NCHW -> [N, C, HW], spatial on lanes.
    # Keep the native dtype (bf16 stays bf16); the kernel accumulates in f32.
    x = x_nchw.reshape(N, C, HW)
    wt = jnp.transpose(fc1_w).astype(jnp.float32)       # [C_in, C_out]
    b2 = (2.0 * fc1_b).reshape(1, C).astype(jnp.float32)

    dtype_bytes = jnp.dtype(x.dtype).itemsize
    tile_hw, lane_width, num_lane_chunks = _pick_spatial_tile(HW, C, dtype_bytes)
    num_tiles = HW // tile_hw

    out_dtype = x.dtype if jnp.issubdtype(x.dtype, jnp.floating) else jnp.float32

    # Explicit VMEM budget: double-buffered x block + resident weight/bias +
    # accumulators + slack; conservative for v7x (64 MiB physical).
    x_block_bytes = C * tile_hw * dtype_bytes
    vmem_limit = max(32 * 1024 * 1024,
                     2 * x_block_bytes + 2 * (C * C + C) * 4
                     + 2 * C * lane_width * 4 + 4 * 1024 * 1024)
    vmem_limit = int(min(vmem_limit, 48 * 1024 * 1024))

    cost = pl.CostEstimate(
        flops=2 * N * HW * C + 2 * N * C * C,
        transcendentals=N * C,
        bytes_accessed=N * HW * C * dtype_bytes + (C * C + C) * 4 + N * C * 4,
    )

    kernel = functools.partial(
        _channel_attention_kernel,
        inv_hw=1.0 / HW,
        num_lane_chunks=num_lane_chunks,
        lane_width=lane_width,
    )

    out = pl.pallas_call(
        kernel,
        out_shape=jax.ShapeDtypeStruct((N, 1, C), out_dtype),
        grid_spec=pltpu.PrefetchScalarGridSpec(
            num_scalar_prefetch=0,
            grid=(N, num_tiles),                 # (parallel batch, reduction)
            in_specs=[
                pl.BlockSpec((1, C, tile_hw), lambda nb, t: (nb, 0, t)),
                pl.BlockSpec((C, C), lambda nb, t: (0, 0)),
                pl.BlockSpec((1, C), lambda nb, t: (0, 0)),
            ],
            out_specs=pl.BlockSpec((1, 1, C), lambda nb, t: (nb, 0, 0)),
            scratch_shapes=[
                pltpu.VMEM((1, C, lane_width), jnp.float32),   # running sum
                pltpu.VMEM((1, C, lane_width), jnp.float32),   # running max
            ],
        ),
        compiler_params=pltpu.CompilerParams(
            dimension_semantics=("parallel", "arbitrary"),
            vmem_limit_bytes=vmem_limit,
        ),
        cost_estimate=cost,
    )(x, wt, b2)

    return out.reshape(N, C, 1, 1)


# -----------------------------------------------------------------------------
# Pure-JAX reference (mirrors the PyTorch forward exactly, unfused)
# -----------------------------------------------------------------------------
def channel_attention_ref(x_nchw, fc1_w, fc1_b):
    avg = jnp.mean(x_nchw.astype(jnp.float32), axis=(2, 3))        # [N, C]
    mx = jnp.max(x_nchw.astype(jnp.float32), axis=(2, 3))          # [N, C]
    avg_out = avg @ fc1_w.T + fc1_b
    max_out = mx @ fc1_w.T + fc1_b
    out = jax.nn.sigmoid(avg_out + max_out)
    return out[:, :, None, None]


if __name__ == "__main__":
    key = jax.random.PRNGKey(0)
    kx, kw, kb = jax.random.split(key, 3)

    N, C, H, W = 2, 4, 16, 16                                       # in_planes = 4
    x = jax.random.normal(kx, (N, C, H, W), jnp.float32)
    fc1_w = jax.random.normal(kw, (C, C), jnp.float32) * (C ** -0.5)
    fc1_b = jax.random.normal(kb, (C,), jnp.float32) * 0.01

    fwd = jax.jit(channel_attention)
    out = jax.block_until_ready(fwd(x, fc1_w, fc1_b))

    ref = channel_attention_ref(x, fc1_w, fc1_b)

    assert out.shape == (N, C, 1, 1), out.shape
    assert bool(jnp.all(jnp.isfinite(out)))
    assert bool(jnp.allclose(out.astype(jnp.float32), ref,
                             rtol=1e-5, atol=1e-5)), (
        float(jnp.max(jnp.abs(out.astype(jnp.float32) - ref))))
    print("KERNEL_OK")
</pallas_src>

<mosaic_0001>
module attributes {stable_mosaic.version = 11 : i64} {
  func.func @_channel_attention_kernel(%arg0: i32, %arg1: i32, %arg2: memref<1x4x256xf32, #tpu.memory_space<vmem>>, %arg3: memref<4x4xf32, #tpu.memory_space<vmem>>, %arg4: memref<1x4xf32, #tpu.memory_space<vmem>>, %arg5: memref<1x1x4xf32, #tpu.memory_space<vmem>>, %arg6: memref<1x4x128xf32, #tpu.memory_space<vmem>>, %arg7: memref<1x4x128xf32, #tpu.memory_space<vmem>>) attributes {dimension_semantics = [#tpu.dimension_semantics<parallel>, #tpu.dimension_semantics<arbitrary>], iteration_bounds = array<i64: 2, 1>, scalar_prefetch = 0 : i64, scratch_operands = 2 : i64, tpu.core_type = #tpu.core_type<tc>, window_params = [{transform_indices = @transform_0, window_bounds = array<i64: 1, 4, 256>}, {pipeline_mode = #tpu.pipeline_mode<synchronous>, transform_indices = @transform_1, window_bounds = array<i64: 4, 4>}, {pipeline_mode = #tpu.pipeline_mode<synchronous>, transform_indices = @transform_2, window_bounds = array<i64: 1, 4>}, {transform_indices = @transform_3, window_bounds = array<i64: 1, 1, 4>}]} {
    %c0_i32 = arith.constant 0 : i32
    %0 = arith.cmpi eq, %arg1, %c0_i32 : i32
    %1 = arith.extui %0 : i1 to i32
    %c0_i32_0 = arith.constant 0 : i32
    %2 = arith.cmpi ne, %1, %c0_i32_0 : i32
    scf.if %2 {
      %cst = arith.constant 0.000000e+00 : f32
      %16 = vector.broadcast %cst : f32 to vector<1x4x128xf32>
      %c0_19 = arith.constant 0 : index
      %c0_20 = arith.constant 0 : index
      %c0_21 = arith.constant 0 : index
      %17 = vector.load %arg6[%c0_19, %c0_20, %c0_21] : memref<1x4x128xf32, #tpu.memory_space<vmem>>, vector<1x4x128xf32>
      tpu.vector_store %arg6[%c0_19, %c0_20, %c0_21], %16 {strides = array<i32>} : memref<1x4x128xf32, #tpu.memory_space<vmem>>, vector<1x4x128xf32>,
      %cst_22 = arith.constant 0xFF800000 : f32
      %18 = vector.broadcast %cst_22 : f32 to vector<1x4x128xf32>
      %c0_23 = arith.constant 0 : index
      %c0_24 = arith.constant 0 : index
      %c0_25 = arith.constant 0 : index
      %19 = vector.load %arg7[%c0_23, %c0_24, %c0_25] : memref<1x4x128xf32, #tpu.memory_space<vmem>>, vector<1x4x128xf32>
      tpu.vector_store %arg7[%c0_23, %c0_24, %c0_25], %18 {strides = array<i32>} : memref<1x4x128xf32, #tpu.memory_space<vmem>>, vector<1x4x128xf32>,
    } else {
    }
    %c0 = arith.constant 0 : index
    %c0_1 = arith.constant 0 : index
    %c0_2 = arith.constant 0 : index
    %3 = vector.load %arg6[%c0, %c0_1, %c0_2] : memref<1x4x128xf32, #tpu.memory_space<vmem>>, vector<1x4x128xf32>
    %c0_3 = arith.constant 0 : index
    %c0_4 = arith.constant 0 : index
    %c0_5 = arith.constant 0 : index
    %4 = vector.load %arg7[%c0_3, %c0_4, %c0_5] : memref<1x4x128xf32, #tpu.memory_space<vmem>>, vector<1x4x128xf32>
    %c0_6 = arith.constant 0 : index
    %c0_7 = arith.constant 0 : index
    %c0_8 = arith.constant 0 : index
    %5 = vector.load %arg2[%c0_6, %c0_7, %c0_8] : memref<1x4x256xf32, #tpu.memory_space<vmem>>, vector<1x4x128xf32>
    %6 = arith.addf %3, %5 : vector<1x4x128xf32>
    %7 = arith.maximumf %4, %5 : vector<1x4x128xf32>
    %c0_9 = arith.constant 0 : index
    %c0_10 = arith.constant 0 : index
    %c128 = arith.constant 128 : index
    %8 = vector.load %arg2[%c0_9, %c0_10, %c128] : memref<1x4x256xf32, #tpu.memory_space<vmem>>, vector<1x4x128xf32>
    %9 = arith.addf %6, %8 : vector<1x4x128xf32>
    %10 = arith.maximumf %7, %8 : vector<1x4x128xf32>
    %c0_11 = arith.constant 0 : index
    %c0_12 = arith.constant 0 : index
    %c0_13 = arith.constant 0 : index
    %11 = vector.load %arg6[%c0_11, %c0_12, %c0_13] : memref<1x4x128xf32, #tpu.memory_space<vmem>>, vector<1x4x128xf32>
    tpu.vector_store %arg6[%c0_11, %c0_12, %c0_13], %9 {strides = array<i32>} : memref<1x4x128xf32, #tpu.memory_space<vmem>>, vector<1x4x128xf32>,
    %c0_14 = arith.constant 0 : index
    %c0_15 = arith.constant 0 : index
    %c0_16 = arith.constant 0 : index
    %12 = vector.load %arg7[%c0_14, %c0_15, %c0_16] : memref<1x4x128xf32, #tpu.memory_space<vmem>>, vector<1x4x128xf32>
    tpu.vector_store %arg7[%c0_14, %c0_15, %c0_16], %10 {strides = array<i32>} : memref<1x4x128xf32, #tpu.memory_space<vmem>>, vector<1x4x128xf32>,
    %c0_i32_17 = arith.constant 0 : i32
    %13 = arith.cmpi eq, %arg1, %c0_i32_17 : i32
    %14 = arith.extui %13 : i1 to i32
    %c0_i32_18 = arith.constant 0 : i32
    %15 = arith.cmpi ne, %14, %c0_i32_18 : i32
    scf.if %15 {
      %c0_19 = arith.constant 0 : index
      %c0_20 = arith.constant 0 : index
      %c0_21 = arith.constant 0 : index
      %16 = vector.load %arg6[%c0_19, %c0_20, %c0_21] : memref<1x4x128xf32, #tpu.memory_space<vmem>>, vector<1x4x128xf32>
      %cst = arith.constant dense<0.000000e+00> : vector<1x4xf32>
      %17 = vector.multi_reduction <add>, %16, %cst [2] : vector<1x4x128xf32> to vector<1x4xf32>
      %cst_22 = arith.constant 3.906250e-03 : f32
      %18 = vector.broadcast %cst_22 : f32 to vector<1x4xf32>
      %19 = arith.mulf %17, %18 : vector<1x4xf32>
      %c0_23 = arith.constant 0 : index
      %c0_24 = arith.constant 0 : index
      %c0_25 = arith.constant 0 : index
      %20 = vector.load %arg7[%c0_23, %c0_24, %c0_25] : memref<1x4x128xf32, #tpu.memory_space<vmem>>, vector<1x4x128xf32>
      %cst_26 = arith.constant dense<0xFF800000> : vector<1x4xf32>
      %21 = vector.multi_reduction <maximumf>, %20, %cst_26 [2] : vector<1x4x128xf32> to vector<1x4xf32>
      %22 = arith.addf %19, %21 : vector<1x4xf32>
      %c0_27 = arith.constant 0 : index
      %c0_28 = arith.constant 0 : index
      %23 = vector.load %arg3[%c0_27, %c0_28] : memref<4x4xf32, #tpu.memory_space<vmem>>, vector<4x4xf32>
      %cst_29 = arith.constant dense<0.000000e+00> : vector<1x4xf32>
      %24 = tpu.matmul %22, %23, %cst_29 {dimension_numbers = #tpu.dot_dimension_numbers<[1], [0], [0], [1], [0, 0, 1, 1], [], []>} : vector<1x4xf32>, vector<4x4xf32>, vector<1x4xf32> -> vector<1x4xf32>
      %c0_30 = arith.constant 0 : index
      %c0_31 = arith.constant 0 : index
      %25 = vector.load %arg4[%c0_30, %c0_31] : memref<1x4xf32, #tpu.memory_space<vmem>>, vector<1x4xf32>
      %26 = arith.addf %24, %25 : vector<1x4xf32>
      %27 = arith.negf %26 : vector<1x4xf32>
      %28 = math.exp %27 : vector<1x4xf32>
      %cst_32 = arith.constant 1.000000e+00 : f32
      %29 = vector.broadcast %cst_32 : f32 to vector<1x4xf32>
      %30 = arith.addf %29, %28 : vector<1x4xf32>
      %31 = arith.divf %29, %30 : vector<1x4xf32>
      %32 = vector.shape_cast %31 : vector<1x4xf32> to vector<1x1x4xf32>
      %c0_33 = arith.constant 0 : index
      %c0_34 = arith.constant 0 : index
      %c0_35 = arith.constant 0 : index
      %33 = vector.load %arg5[%c0_33, %c0_34, %c0_35] : memref<1x1x4xf32, #tpu.memory_space<vmem>>, vector<1x1x4xf32>
      tpu.vector_store %arg5[%c0_33, %c0_34, %c0_35], %32 {strides = array<i32>} : memref<1x1x4xf32, #tpu.memory_space<vmem>>, vector<1x1x4xf32>,
    } else {
    }
    return
  }
  func.func @transform_0(%arg0: i32, %arg1: i32) -> (i32, i32, i32) {
    %c0_i32 = arith.constant 0 : i32
    %c0_i32_0 = arith.constant 0 : i32
    return %arg0, %c0_i32, %arg1 : i32, i32, i32
  }
  func.func @transform_1(%arg0: i32, %arg1: i32) -> (i32, i32) {
    %c0_i32 = arith.constant 0 : i32
    %c0_i32_0 = arith.constant 0 : i32
    %c0_i32_1 = arith.constant 0 : i32
    return %c0_i32, %c0_i32_0 : i32, i32
  }
  func.func @transform_2(%arg0: i32, %arg1: i32) -> (i32, i32) {
    %c0_i32 = arith.constant 0 : i32
    %c0_i32_0 = arith.constant 0 : i32
    %c0_i32_1 = arith.constant 0 : i32
    return %c0_i32, %c0_i32_0 : i32, i32
  }
  func.func @transform_3(%arg0: i32, %arg1: i32) -> (i32, i32, i32) {
    %c0_i32 = arith.constant 0 : i32
    %c0_i32_0 = arith.constant 0 : i32
    %c0_i32_1 = arith.constant 0 : i32
    return %arg0, %c0_i32, %c0_i32_0 : i32, i32, i32
  }
}

</mosaic_0001>

<llo_original>
// kernel: channel_attention.1
$region0: #{channel_attention.1}
  #allocation0 [shape = 'u32[]', space=smem, size = 0x4, offset = 0x4, fixed_abs, tag = 'smem constant byte address 0x4 - core index']
  #allocation1 [shape = 'u32[144,128]{1,0:T(1,128)}', space=vmem, size = 0x12000, scoped, tag = 'internal scratch']
  #allocation2 [shape = 'f32[1,4,128]{2,1,0:T(4,128)}', space=vmem, size = 0x800, scoped, tag = 'scratch operand']
  #allocation3 [shape = 'f32[1,4,128]{2,1,0:T(4,128)}', space=vmem, size = 0x800, scoped, tag = 'scratch operand']
  %s0 = inlined_call_operand.vmem [shape: f32[2,4,256], index: 0, kind: input, shape index: {}]
  %s1 = inlined_call_operand.vmem [shape: f32[4,4], index: 1, kind: input, shape index: {}]
  %s2 = inlined_call_operand.vmem [shape: f32[1,4], index: 2, kind: input, shape index: {}]
  %s3 = inlined_call_operand.hbm [shape: f32[2,1,4], index: 3, kind: output, shape index: {}]
  %s4 = sld [smem:[#allocation0]]
  $region53: #{channel_attention.1} parent=0
    _
  %s6 = ssub.s32 1, %s4
  %s7 = scalar_select 0, %s6, %s4
  $region1: #{channel_attention.1} parent=0
    #allocation4 [shape = 'u8[1024]{0}', space=vmem, size = 0x400, scoped, tag = 'output window, operand 0']
    #allocation5 [shape = 's32[2]{0}', space=sflag, size = 0x8, scoped, tag = 'scoped memory for channel_attention.1']
    %8 = vsyncpa [#allocation5], 0
    %s9 = scalar_lea.sflag [#allocation5], 1
    %10 = vsyncpa %s9, 0
    loop: start=0, step=1, limit=4
    $region2: #{channel_attention.1} parent=1 // loop_pre_header
      _
    $region3: #{channel_attention.1} parent=1 // loop_header
      %s12 = sphi 0, %s16
      %p13 = scmp.ge.s32.totalorder %s12, 4
      %s19 = sphi 0, %s31
      %s20 = sphi 0, %s27
      %s21 = sphi 0, %s19
      %s22 = sphi 0, %s20
      %s23 = sphi 0, %s21
      %s24 = sphi 0, %s22
      %s36 = sphi 0, %s38
      %s39 = sphi 0, %s36
      %s40 = sphi 0, %s39
      %s56 = sphi 0, %s40
      %s60 = sphi 0, %s60
      %s62 = sphi 0, %s60
      %s63 = sphi 0, %s62
      %s77 = sphi 0, %s63
      %s81 = sphi 0, %s81
      %s83 = sphi 0, %s81
      %s84 = sphi 0, %s83
      %s98 = sphi 0, %s84
      %s104 = sphi 0, %s106
      %s107 = sphi 0, %s104
      %s108 = sphi 0, %s107
      %s124 = sphi 0, %s108
    $region4: #{channel_attention.1} parent=1 // loop_header_branch
      %15 = sbr.rel (%p13) target = $region8
    $region5: #{channel_attention.1} parent=1 // loop_body
      %s17 = ssub.s32 %s12, 1
      %s18 = ssub.s32 %s12, 2
      %s25 = sadd.s32 1, %s20
      %p26 = scmp.ge.s32.totalorder %s25, 1
      %s27 = scalar_select %p26, 0, %s25
      %s28 = sadd.s32 1, %s19
      %s29 = scalar_select %p26, %s28, %s19
      %p30 = scmp.ge.s32.totalorder %s29, 2
      %s31 = scalar_select %p30, 0, %s29
      %s32 = ssub.s32 %s19, %s31
      %s33 = ssub.s32 %s20, %s27
      %s34 = sor.u32 %s32, %s33
      %p35 = scmp.eq.s32.totalorder %s34, 0
      %s37 = sadd.s32 %s36, 1
      %s38 = scalar_select %p35, %s36, %s37
      %p41 = pneg %p35
      %p42 = scmp.eq.s32.totalorder %s12, 1
      %p43 = por %p41, %p42
      %p44 = scmp.ne.s32.totalorder %s36, %s39
      %p45 = scmp.eq.s32.totalorder %s12, 0
      %p46 = por %p44, %p45
      %p47 = scmp.ne.s32.totalorder %s36, %s39
      %p48 = scmp.eq.s32.totalorder %s17, 1
      %p49 = por %p47, %p48
      %p50 = scmp.ne.s32.totalorder %s39, %s40
      %p51 = scmp.eq.s32.totalorder %s17, 0
      %p52 = por %p50, %p51
      %p53 = scmp.ne.s32.totalorder %s39, %s40
      %p54 = scmp.eq.s32.totalorder %s18, 1
      %p55 = por %p53, %p54
      %p57 = scmp.ne.s32.totalorder %s40, %s56
      %p58 = scmp.eq.s32.totalorder %s18, 0
      %p59 = por %p57, %p58
      %s61 = sadd.s32 %s60, 1
      %p64 = scmp.eq.s32.totalorder %s12, 1
      %p65 = scmp.ne.s32.totalorder %s60, %s62
      %p66 = scmp.eq.s32.totalorder %s12, 0
      %p67 = por %p65, %p66
      %p68 = scmp.ne.s32.totalorder %s60, %s62
      %p69 = scmp.eq.s32.totalorder %s17, 1
      %p70 = por %p68, %p69
      %p71 = scmp.ne.s32.totalorder %s62, %s63
      %p72 = scmp.eq.s32.totalorder %s17, 0
      %p73 = por %p71, %p72
      %p74 = scmp.ne.s32.totalorder %s62, %s63
      %p75 = scmp.eq.s32.totalorder %s18, 1
      %p76 = por %p74, %p75
      %p78 = scmp.ne.s32.totalorder %s63, %s77
      %p79 = scmp.eq.s32.totalorder %s18, 0
      %p80 = por %p78, %p79
      %s82 = sadd.s32 %s81, 1
      %p85 = scmp.eq.s32.totalorder %s12, 1
      %p86 = scmp.ne.s32.totalorder %s81, %s83
      %p87 = scmp.eq.s32.totalorder %s12, 0
      %p88 = por %p86, %p87
      %p89 = scmp.ne.s32.totalorder %s81, %s83
      %p90 = scmp.eq.s32.totalorder %s17, 1
      %p91 = por %p89, %p90
      %p92 = scmp.ne.s32.totalorder %s83, %s84
      %p93 = scmp.eq.s32.totalorder %s17, 0
      %p94 = por %p92, %p93
      %p95 = scmp.ne.s32.totalorder %s83, %s84
      %p96 = scmp.eq.s32.totalorder %s18, 1
      %p97 = por %p95, %p96
      %p99 = scmp.ne.s32.totalorder %s84, %s98
      %p100 = scmp.eq.s32.totalorder %s18, 0
      %p101 = por %p99, %p100
      %s102 = ssub.s32 %s19, %s31
      %p103 = scmp.eq.s32.totalorder %s102, 0
      %s105 = sadd.s32 %s104, 1
      %s106 = scalar_select %p103, %s104, %s105
      %p109 = pneg %p103
      %p110 = scmp.eq.s32.totalorder %s12, 1
      %p111 = por %p109, %p110
      %p112 = scmp.ne.s32.totalorder %s104, %s107
      %p113 = scmp.eq.s32.totalorder %s12, 0
      %p114 = por %p112, %p113
      %p115 = scmp.ne.s32.totalorder %s104, %s107
      %p116 = scmp.eq.s32.totalorder %s17, 1
      %p117 = por %p115, %p116
      %p118 = scmp.ne.s32.totalorder %s107, %s108
      %p119 = scmp.eq.s32.totalorder %s17, 0
      %p120 = por %p118, %p119
      %p121 = scmp.ne.s32.totalorder %s107, %s108
      %p122 = scmp.eq.s32.totalorder %s18, 1
      %p123 = por %p121, %p122
      %p125 = scmp.ne.s32.totalorder %s108, %s124
      %p126 = scmp.eq.s32.totalorder %s18, 0
      %p127 = por %p125, %p126
      %p128 = scmp.le.s32.totalorder 1, %s12
      %p129 = scmp.lt.s32.totalorder %s12, 3
      %p130 = pnand %p128, %p129
      %p131 = pneg %p130
      // Predicated region
      $region9: #{channel_attention.1} parent=5 // pred_check
        _
      $region10: #{channel_attention.1} parent=5 // pred_check_branch
        %133 = sbr.rel (%p130) target = $region12
      $region11: #{channel_attention.1} parent=5 // pred_region
        %s134 = ssub.s32 %s12, 1
        // Predicated region
        $region13: #{channel_attention.1} parent=11 // pred_check
          %p135 = pneg %p73
        $region14: #{channel_attention.1} parent=11 // pred_check_branch
          %137 = sbr.rel (%p135) target = $region16
        $region15: #{channel_attention.1} parent=11 // pred_region
          _
        $region16: #{channel_attention.1} parent=11 // pred_fallthru
          _
        // Predicated region
        $region17: #{channel_attention.1} parent=11 // pred_check
          %p138 = pneg %p94
        $region18: #{channel_attention.1} parent=11 // pred_check_branch
          %140 = sbr.rel (%p138) target = $region20
        $region19: #{channel_attention.1} parent=11 // pred_region
          _
        $region20: #{channel_attention.1} parent=11 // pred_fallthru
          _
      $region12: #{channel_attention.1} parent=5 // pred_fallthru
        _
      %p141 = scmp.lt.s32.totalorder %s12, 2
      // Predicated region
      $region21: #{channel_attention.1} parent=5 // pred_check
        %p142 = pneg %p141
      $region22: #{channel_attention.1} parent=5 // pred_check_branch
        %144 = sbr.rel (%p142) target = $region24
      $region23: #{channel_attention.1} parent=5 // pred_region
        // Predicated region
        $region25: #{channel_attention.1} parent=23 // pred_check
          %p145 = pneg %p46
        $region26: #{channel_attention.1} parent=23 // pred_check_branch
          %147 = sbr.rel (%p145) target = $region28
        $region27: #{channel_attention.1} parent=23 // pred_region
          %s148 = smul.u32 2, %s20
          %p149 = scmp.lt.s32.totalorder %s19, 1
          %s150 = scalar_select %p149, %s19, 1
          %p151 = scmp.lt.s32.totalorder %s148, 1
          %s152 = scalar_select %p151, %s148, 1
          %s153 = smul.addr %s150, 2
          %s154 = sadd.s32 %s152, %s153
          %s155 = smul.addr %s154, 4
          %s156 = scalar_lea.vmem %s0, %s155
          %s157 = smul.u32 2, %s20
        $region28: #{channel_attention.1} parent=23 // pred_fallthru
          _
      $region24: #{channel_attention.1} parent=5 // pred_fallthru
        _
      %p158 = scmp.le.s32.totalorder 1, %s12
      %p159 = scmp.lt.s32.totalorder %s12, 3
      %p160 = pnand %p158, %p159
      %p161 = pneg %p160
      // Predicated region
      $region29: #{channel_attention.1} parent=5 // pred_check
        _
      $region30: #{channel_attention.1} parent=5 // pred_check_branch
        %163 = sbr.rel (%p160) target = $region32
      $region31: #{channel_attention.1} parent=5 // pred_region
        %s164 = ssub.s32 %s12, 1
        %s165 = smul.u32 2, %s22
        %p166 = scmp.lt.s32.totalorder %s21, 1
        %s167 = scalar_select %p166, %s21, 1
        %p168 = scmp.lt.s32.totalorder %s165, 1
        %s169 = scalar_select %p168, %s165, 1
        %s170 = smul.addr %s167, 2
        %s171 = sadd.s32 %s169, %s170
        %s172 = smul.addr %s171, 4
        %s173 = scalar_lea.vmem %s0, %s172
        %p174 = pneg %p52
        %p175 = pneg %p49
        %p176 = pneg %p73
        %p177 = pneg %p70
        %p178 = pneg %p94
        %p179 = pneg %p91
        %p180 = pneg %p120
        %p181 = pneg %p117
        %s182 = sand.u32 %s107, 1
        %s183 = scalar_lea.sflag [#allocation5], %s182
        %s184 = sand.u32 %s107, 1
        %s185 = scalar_lea.vmem [#allocation4], %s184
        %s186 = smul.u32 2, %s22
        %p187 = scmp.lt.s32.totalorder %s21, 1
        %s188 = scalar_select %p187, %s21, 1
        %p189 = scmp.lt.s32.totalorder %s186, 1
        %s190 = scalar_select %p189, %s186, 1
        %s191 = smul.addr %s188, 2
        %s192 = sadd.s32 %s190, %s191
        %s193 = smul.addr %s192, 4
        %s194 = scalar_lea.vmem %s0, %s193
        %s195 = smul.u32 2, %s22
        %p196 = scmp.eq.s32.totalorder %s22, 0
        // Predicated region
        $region33: #{channel_attention.1} parent=31 // pred_check
          %p197 = pneg %p196
        $region34: #{channel_attention.1} parent=31 // pred_check_branch
          %199 = sbr.rel (%p197) target = $region36
        $region35: #{channel_attention.1} parent=31 // pred_region
          %200 = vst [vmem:[#allocation2] sm:$0xf] 0.0
          %201 = vst [vmem:[#allocation3] sm:$0xf] -inf
        $region36: #{channel_attention.1} parent=31 // pred_fallthru
          _
        %v202 = vld [vmem:[#allocation2] sm:$0xf]
        %v203 = vld [vmem:[#allocation3] sm:$0xf]
        %v204 = vld [vmem:[%s194] sm:$0xf]
        %v205 = vadd.f32 %v202, %v204
        %v206 = vmax.f32 %v203, %v204
        %v207 = vld [vmem:[%s194 + $0x4] sm:$0xf]
        %v208 = vadd.f32 %v205, %v207
        %v209 = vmax.f32 %v206, %v207
        %210 = vst [vmem:[#allocation2] sm:$0xf] %v208
        %211 = vst [vmem:[#allocation3] sm:$0xf] %v209
        // Predicated region
        $region37: #{channel_attention.1} parent=31 // pred_check
          %p212 = pneg %p196
        $region38: #{channel_attention.1} parent=31 // pred_check_branch
          %214 = sbr.rel (%p212) target = $region40
        $region39: #{channel_attention.1} parent=31 // pred_region
          %v215 = vld [vmem:[#allocation2] sm:$0xf]
          %vm216 = vcmask 1043456
          %v217 = vsel %vm216, %v215, 0.0
          %218 = vadd.xlane.f32.xlu0 %v217
          %v219 = vpop.xlane.xlu0 %218
          %v220 = vmul.f32 %v219, 0.00390625
          %v221 = vld [vmem:[#allocation3] sm:$0xf]
          %v222 = vsel %vm216, %v221, -inf
          %223 = vmax.xlane.f32.xlu0 %v222
          %v224 = vpop.xlane.xlu0 %223
          %v225 = vadd.f32 %v220, %v224
          %v226 = vld [vmem:[%s1] sm:$0xf]
          %v227 = vld [vmem:[%s2] sm:$0x1]
          %v229 = vlaneseq
          %v230 = vand.u32 %v229, 127
          %v231 = vlaneseq
          %v232 = vshrl.u32 %v231, 7
          %v233 = vsub.s32 %v230, %v232
          %v234 = vrot.slane %v225, %v233
          %vm235 = vcmask 31744
          %v236 = vsel %vm235, %v234, 0
          %v239 = vsel %vm216, %v226, 0
          %241 = vmatprep.subr.mxu0 0.0
          %242 = vmatpush1.msra.mxu0 %v239
          %243 = vmatprep.subr.mxu0 0.0
          %244 = vmatpush1.msra.mxu0 0.0
          %245 = vmatprep.subr.mxu0 0.0
          %246 = vmatpush1.msra.mxu0 0.0
          %247 = vmatprep.subr.mxu0 0.0
          %248 = vmatpush1.msra.mxu0 0.0
          %249 = vmatprep.subr.mxu0 0.0
          %250 = vmatpush1.msra.mxu0 0.0
          %251 = vmatprep.subr.mxu0 0.0
          %252 = vmatpush1.msra.mxu0 0.0
          %253 = vmatprep.subr.mxu0 0.0
          %254 = vmatpush1.msra.mxu0 0.0
          %255 = vmatprep.subr.mxu0 0.0
          %256 = vmatpush1.msra.mxu0 0.0
          %257 = vmatprep.subr.mxu0 0.0
          %258 = vmatpush1.msra.mxu0 0.0
          %259 = vmatprep.subr.mxu0 0.0
          %260 = vmatpush1.msra.mxu0 0.0
          %261 = vmatprep.subr.mxu0 0.0
          %262 = vmatpush1.msra.mxu0 0.0
          %263 = vmatprep.subr.mxu0 0.0
          %264 = vmatpush1.msra.mxu0 0.0
          %265 = vmatprep.subr.mxu0 0.0
          %266 = vmatpush1.msra.mxu0 0.0
          %267 = vmatprep.subr.mxu0 0.0
          %268 = vmatpush1.msra.mxu0 0.0
          %269 = vmatprep.subr.mxu0 0.0
          %270 = vmatpush1.msra.mxu0 0.0
          %271 = vmatprep.subr.mxu0 0.0
          %272 = vmatpush1.msra.mxu0 0.0
          %273 = vmatprep.subr.mxu0 0.0
          %274 = vmatpush1.msra.mxu0 0.0
          %275 = vmatprep.subr.mxu0 0.0
          %276 = vmatpush1.msra.mxu0 0.0
          %277 = vmatprep.subr.mxu0 0.0
          %278 = vmatpush1.msra.mxu0 0.0
          %279 = vmatprep.subr.mxu0 0.0
          %280 = vmatpush1.msra.mxu0 0.0
          %281 = vmatprep.subr.mxu0 0.0
          %282 = vmatpush1.msra.mxu0 0.0
          %283 = vmatprep.subr.mxu0 0.0
          %284 = vmatpush1.msra.mxu0 0.0
          %285 = vmatprep.subr.mxu0 0.0
          %286 = vmatpush1.msra.mxu0 0.0
          %287 = vmatprep.subr.mxu0 0.0
          %288 = vmatpush1.msra.mxu0 0.0
          %289 = vmatprep.subr.mxu0 0.0
          %290 = vmatpush1.msra.mxu0 0.0
          %291 = vmatprep.subr.mxu0 0.0
          %292 = vmatpush1.msra.mxu0 0.0
          %293 = vmatprep.subr.mxu0 0.0
          %294 = vmatpush1.msra.mxu0 0.0
          %295 = vmatprep.subr.mxu0 0.0
          %296 = vmatpush1.msra.mxu0 0.0
          %297 = vmatprep.subr.mxu0 0.0
          %298 = vmatpush1.msra.mxu0 0.0
          %299 = vmatprep.subr.mxu0 0.0
          %300 = vmatpush1.msra.mxu0 0.0
          %301 = vmatprep.subr.mxu0 0.0
          %302 = vmatpush1.msra.mxu0 0.0
          %303 = vmatprep.subr.mxu0 0.0
          %304 = vmatpush1.msra.mxu0 0.0
          %305 = vmatprep.mubr.f32.mxu0 0.0
          %306 = vmatmul.mubr.f32.gmra.mrb[0].mxu0 %v236
          %v307 = vpop.f32.mrb[0].mxu0
          %v308 = vadd.f32 %v227, %v307
          %v309 = vpop.f32.mrb[0].mxu0
          %310 = vdwg.mxu0
          %v311 = vxor.u32 %v308, 2147483648
          %v312 = vmul.f32 %v311, 1.442695
          %v313 = vpow.pop %v312
          %v314 = vadd.f32 %v313, 1.0
          %v315 = vrcp.pop %v314
          %v316 = vmul.f32 1.0, %v315
          %vm317 = vcmask 24576
          %318 = vst.msk [vmem:[%s185] sm:$0x1] %vm317, %v316
        $region40: #{channel_attention.1} parent=31 // pred_fallthru
          _
        %s319 = sand.u32 %s107, 1
        %s320 = scalar_lea.sflag [#allocation5], %s319
        %s321 = sand.u32 %s107, 1
        %s322 = scalar_lea.vmem [#allocation4], %s321
        // Predicated region
        $region41: #{channel_attention.1} parent=31 // pred_check
          %p323 = pneg %p117
        $region42: #{channel_attention.1} parent=31 // pred_check_branch
          %325 = sbr.rel (%p323) target = $region44
        $region43: #{channel_attention.1} parent=31 // pred_region
          %s327 = ssub.s32 16, 16
          %328 = vsyncadd %s320, %s327
          %s329 = smul.addr %s21, 16
          %s330 = scalar_lea.hbm %s3, %s329
          %s332 = sshll.u32 %s322, 4
          %s333 = int_to_ptr.vmem [resolvable:$true] %s332
          %335 = dma.vmem_to_hbm [thread:$0]  %s333, 16, %s330, %s320
        $region44: #{channel_attention.1} parent=31 // pred_fallthru
          _
      $region32: #{channel_attention.1} parent=5 // pred_fallthru
        _
      %p336 = scmp.le.s32.totalorder 2, %s12
      // Predicated region
      $region45: #{channel_attention.1} parent=5 // pred_check
        %p337 = pneg %p336
      $region46: #{channel_attention.1} parent=5 // pred_check_branch
        %339 = sbr.rel (%p337) target = $region48
      $region47: #{channel_attention.1} parent=5 // pred_region
        %s340 = ssub.s32 %s12, 2
        // Predicated region
        $region49: #{channel_attention.1} parent=47 // pred_check
          %p341 = pneg %p123
        $region50: #{channel_attention.1} parent=47 // pred_check_branch
          %343 = sbr.rel (%p341) target = $region52
        $region51: #{channel_attention.1} parent=47 // pred_region
          %s344 = sand.u32 %s108, 1
          %s345 = scalar_lea.sflag [#allocation5], %s344
          %s346 = sand.u32 %s108, 1
          %s347 = scalar_lea.vmem [#allocation4], %s346
          %348 = dma.done %s345, 16
        $region52: #{channel_attention.1} parent=47 // pred_fallthru
          _
      $region48: #{channel_attention.1} parent=5 // pred_fallthru
        _
    $region6: #{channel_attention.1} parent=1 // loop_footer
      %s16 = sadd.s32 1, %s12
    $region7: #{channel_attention.1} parent=1 // loop_footer_branch
      %11 = sbr.rel target = $region3
    $region8: #{channel_attention.1} parent=1 // loop_exit
      _
    %349 = vsyncpa [#allocation5], 1
    %s350 = scalar_lea.sflag [#allocation5], 1
    %351 = vsyncpa %s350, 1

</llo_original>
